<compile_context>
chip_gen: v5e
topology: v5e:2x2
jax: 0.10.0
libtpu: 0.0.40
codegen_flags: <defaults>
</compile_context>

<pallas_src>
import functools

import jax
import jax.numpy as jnp
from jax.experimental import pallas as pl
from jax.experimental.pallas import tpu as pltpu


def _bifpn_add2_kernel(w_ref, x0_ref, x1_ref, cw_ref, cb_ref, o_ref, *, eps):
    """Fused weighted-add -> SiLU -> 1x1 conv (+bias) on one (C1, TQ) tile.

    w_ref : SMEM (2,)        raw fusion weights (the nn.Parameter `w`)
    x0_ref: VMEM (1, C1, TQ) first input, channels on sublanes, spatial on lanes
    x1_ref: VMEM (1, C1, TQ) second input
    cw_ref: VMEM (C2, C1)    1x1 conv weight
    cb_ref: VMEM (C2, 1)     conv bias
    o_ref : VMEM (1, C2, TQ) output tile
    """
    # weight = w / (w.sum() + eps)  — scalar path (SMEM / sregs), exact module math.
    w0 = w_ref[0]
    w1 = w_ref[1]
    inv = 1.0 / (w0 + w1 + eps)
    a0 = w0 * inv
    a1 = w1 * inv

    y = a0 * x0_ref[0] + a1 * x1_ref[0]                    # (C1, TQ)   VPU
    y = y * (1.0 / (1.0 + jnp.exp(-y)))                    # SiLU       VPU + EUP

    acc = jnp.dot(cw_ref[...], y,                          # (C2, TQ)   MXU
                  preferred_element_type=jnp.float32)
    o_ref[0] = (acc + cb_ref[...]).astype(o_ref.dtype)


def bifpn_add2(x0, x1, w, conv_w, conv_b, *, eps=1e-4, tq=None):
    """BiFPN_Add2 forward.

    x0, x1 : (N, C1, H, W) float32 (NCHW, matching PyTorch)
    w      : (2,) fusion weights (nn.Parameter)
    conv_w : (C2, C1, 1, 1) or (C2, C1) 1x1 conv weight
    conv_b : (C2,) conv bias
    returns: (N, C2, H, W) float32
    """
    N, C1, H, W = x0.shape
    assert x1.shape == x0.shape
    C2 = conv_w.shape[0]
    HW = H * W

    # Spatial tile: lane-dense multiple of 128, capped so buffers also fit v7x VMEM.
    if tq is None:
        tq = HW
        while tq > 4096 and tq % 2 == 0:
            tq //= 2
    assert HW % tq == 0 and tq % 128 == 0, "H*W must tile into multiples of 128"

    # Free contiguous reshapes only — no transpose / concat / strided glue in XLA.
    x0r = x0.reshape(N, C1, HW).astype(jnp.float32)
    x1r = x1.reshape(N, C1, HW).astype(jnp.float32)
    cw = conv_w.reshape(C2, C1).astype(jnp.float32)
    cb = conv_b.reshape(C2, 1).astype(jnp.float32)
    wv = w.reshape(2).astype(jnp.float32)

    kern = functools.partial(_bifpn_add2_kernel, eps=eps)
    out = pl.pallas_call(
        kern,
        out_shape=jax.ShapeDtypeStruct((N, C2, HW), jnp.float32),
        grid=(N, HW // tq),
        in_specs=[
            pl.BlockSpec(memory_space=pltpu.MemorySpace.SMEM),     # w: whole (2,) in SMEM
            pl.BlockSpec((1, C1, tq), lambda n, q: (n, 0, q)),     # x0 tile
            pl.BlockSpec((1, C1, tq), lambda n, q: (n, 0, q)),     # x1 tile
            pl.BlockSpec((C2, C1), lambda n, q: (0, 0)),           # conv weight (resident)
            pl.BlockSpec((C2, 1), lambda n, q: (0, 0)),            # conv bias   (resident)
        ],
        out_specs=pl.BlockSpec((1, C2, tq), lambda n, q: (n, 0, q)),
        compiler_params=pltpu.CompilerParams(
            dimension_semantics=("parallel", "parallel")),          # megacore on v7x
    )(wv, x0r, x1r, cw, cb)
    return out.reshape(N, C2, H, W)


def _reference(x0, x1, w, conv_w, conv_b, eps=1e-4):
    """Pure-JAX reference of BiFPN_Add2.forward (eval semantics)."""
    weight = w / (jnp.sum(w) + eps)
    y = weight[0] * x0 + weight[1] * x1
    y = y * jax.nn.sigmoid(y)
    cw = conv_w.reshape(conv_w.shape[0], -1)
    out = jnp.einsum("oi,nihw->nohw", cw, y) + conv_b.reshape(1, -1, 1, 1)
    return out


if __name__ == "__main__":
    key = jax.random.PRNGKey(0)
    kx0, kx1, kw, kcw, kcb = jax.random.split(key, 5)

    N, C1, C2, H, W = 2, 128, 128, 16, 16
    x0 = jax.random.normal(kx0, (N, C1, H, W), jnp.float32)
    x1 = jax.random.normal(kx1, (N, C1, H, W), jnp.float32)
    # nn.Parameter(torch.ones(2)) at init; perturb slightly so the gate is non-trivial.
    w = jnp.ones((2,), jnp.float32) + 0.1 * jax.random.normal(kw, (2,), jnp.float32)
    conv_w = 0.05 * jax.random.normal(kcw, (C2, C1, 1, 1), jnp.float32)
    conv_b = 0.05 * jax.random.normal(kcb, (C2,), jnp.float32)

    out = bifpn_add2(x0, x1, w, conv_w, conv_b)
    out = jax.block_until_ready(out)

    assert out.shape == (N, C2, H, W) and out.dtype == jnp.float32
    assert bool(jnp.all(jnp.isfinite(out)))
    ref = _reference(x0, x1, w, conv_w, conv_b)
    assert bool(jnp.allclose(out, ref, rtol=1e-2, atol=1e-2)), \
        float(jnp.max(jnp.abs(out - ref)))
    print("KERNEL_OK")
</pallas_src>

<mosaic_0001>
module attributes {stable_mosaic.version = 11 : i64} {
  func.func @_bifpn_add2_kernel(%arg0: i32, %arg1: i32, %arg2: memref<2xf32, #tpu.memory_space<smem>>, %arg3: memref<1x128x256xf32, #tpu.memory_space<vmem>>, %arg4: memref<1x128x256xf32, #tpu.memory_space<vmem>>, %arg5: memref<128x128xf32, #tpu.memory_space<vmem>>, %arg6: memref<128x1xf32, #tpu.memory_space<vmem>>, %arg7: memref<1x128x256xf32, #tpu.memory_space<vmem>>) attributes {dimension_semantics = [#tpu.dimension_semantics<parallel>, #tpu.dimension_semantics<parallel>], iteration_bounds = array<i64: 2, 1>, scalar_prefetch = 0 : i64, scratch_operands = 0 : i64, tpu.core_type = #tpu.core_type<tc>, window_params = [{transform_indices = @transform_0, window_bounds = array<i64: 2>}, {transform_indices = @transform_1, window_bounds = array<i64: 1, 128, 256>}, {transform_indices = @transform_2, window_bounds = array<i64: 1, 128, 256>}, {pipeline_mode = #tpu.pipeline_mode<synchronous>, transform_indices = @transform_3, window_bounds = array<i64: 128, 128>}, {pipeline_mode = #tpu.pipeline_mode<synchronous>, transform_indices = @transform_4, window_bounds = array<i64: 128, 1>}, {transform_indices = @transform_5, window_bounds = array<i64: 1, 128, 256>}]} {
    %c0 = arith.constant 0 : index
    %0 = memref.load %arg2[%c0] : memref<2xf32, #tpu.memory_space<smem>>
    %c1 = arith.constant 1 : index
    %1 = memref.load %arg2[%c1] : memref<2xf32, #tpu.memory_space<smem>>
    %2 = arith.addf %0, %1 : f32
    %cst = arith.constant 9.99999974E-5 : f32
    %3 = arith.addf %2, %cst : f32
    %cst_0 = arith.constant 1.000000e+00 : f32
    %4 = arith.divf %cst_0, %3 : f32
    %5 = arith.mulf %0, %4 : f32
    %6 = arith.mulf %1, %4 : f32
    %c0_1 = arith.constant 0 : index
    %c0_2 = arith.constant 0 : index
    %c0_3 = arith.constant 0 : index
    %7 = vector.load %arg3[%c0_1, %c0_2, %c0_3] : memref<1x128x256xf32, #tpu.memory_space<vmem>>, vector<1x128x256xf32>
    %8 = vector.shape_cast %7 : vector<1x128x256xf32> to vector<128x256xf32>
    %9 = vector.broadcast %5 : f32 to vector<128x256xf32>
    %10 = arith.mulf %9, %8 : vector<128x256xf32>
    %c0_4 = arith.constant 0 : index
    %c0_5 = arith.constant 0 : index
    %c0_6 = arith.constant 0 : index
    %11 = vector.load %arg4[%c0_4, %c0_5, %c0_6] : memref<1x128x256xf32, #tpu.memory_space<vmem>>, vector<1x128x256xf32>
    %12 = vector.shape_cast %11 : vector<1x128x256xf32> to vector<128x256xf32>
    %13 = vector.broadcast %6 : f32 to vector<128x256xf32>
    %14 = arith.mulf %13, %12 : vector<128x256xf32>
    %15 = arith.addf %10, %14 : vector<128x256xf32>
    %cst_7 = arith.constant 0.000000e+00 : f32
    %16 = vector.broadcast %cst_7 : f32 to vector<128x256xf32>
    %17 = arith.subf %16, %15 : vector<128x256xf32>
    %18 = math.exp %17 : vector<128x256xf32>
    %cst_8 = arith.constant 1.000000e+00 : f32
    %19 = vector.broadcast %cst_8 : f32 to vector<128x256xf32>
    %20 = arith.addf %19, %18 : vector<128x256xf32>
    %cst_9 = arith.constant 1.000000e+00 : f32
    %21 = vector.broadcast %cst_9 : f32 to vector<128x256xf32>
    %22 = arith.divf %21, %20 : vector<128x256xf32>
    %23 = arith.mulf %15, %22 : vector<128x256xf32>
    %c0_10 = arith.constant 0 : index
    %c0_11 = arith.constant 0 : index
    %24 = vector.load %arg5[%c0_10, %c0_11] : memref<128x128xf32, #tpu.memory_space<vmem>>, vector<128x128xf32>
    %cst_12 = arith.constant dense<0.000000e+00> : vector<128x256xf32>
    %25 = tpu.matmul %24, %23, %cst_12 {dimension_numbers = #tpu.dot_dimension_numbers<[1], [0], [0], [1], [0, 0, 1, 1], [], []>} : vector<128x128xf32>, vector<128x256xf32>, vector<128x256xf32> -> vector<128x256xf32>
    %c0_13 = arith.constant 0 : index
    %c0_14 = arith.constant 0 : index
    %26 = vector.load %arg6[%c0_13, %c0_14] : memref<128x1xf32, #tpu.memory_space<vmem>>, vector<128x1xf32>
    %27 = vector.broadcast %26 : vector<128x1xf32> to vector<128x256xf32>
    %28 = arith.addf %25, %27 : vector<128x256xf32>
    %c0_15 = arith.constant 0 : index
    %c0_16 = arith.constant 0 : index
    %c0_17 = arith.constant 0 : index
    %29 = vector.load %arg7[%c0_15, %c0_16, %c0_17] : memref<1x128x256xf32, #tpu.memory_space<vmem>>, vector<1x128x256xf32>
    %30 = vector.shape_cast %29 : vector<1x128x256xf32> to vector<128x256xf32>
    %31 = vector.shape_cast %28 : vector<128x256xf32> to vector<1x128x256xf32>
    tpu.vector_store %arg7[%c0_15, %c0_16, %c0_17], %31 {strides = array<i32>} : memref<1x128x256xf32, #tpu.memory_space<vmem>>, vector<1x128x256xf32>,
    return
  }
  func.func @transform_0(%arg0: i32, %arg1: i32) -> i32 {
    %c0_i32 = arith.constant 0 : i32
    %c0_i32_0 = arith.constant 0 : i32
    return %c0_i32 : i32
  }
  func.func @transform_1(%arg0: i32, %arg1: i32) -> (i32, i32, i32) {
    %c0_i32 = arith.constant 0 : i32
    %c0_i32_0 = arith.constant 0 : i32
    return %arg0, %c0_i32, %arg1 : i32, i32, i32
  }
  func.func @transform_2(%arg0: i32, %arg1: i32) -> (i32, i32, i32) {
    %c0_i32 = arith.constant 0 : i32
    %c0_i32_0 = arith.constant 0 : i32
    return %arg0, %c0_i32, %arg1 : i32, i32, i32
  }
  func.func @transform_3(%arg0: i32, %arg1: i32) -> (i32, i32) {
    %c0_i32 = arith.constant 0 : i32
    %c0_i32_0 = arith.constant 0 : i32
    %c0_i32_1 = arith.constant 0 : i32
    return %c0_i32, %c0_i32_0 : i32, i32
  }
  func.func @transform_4(%arg0: i32, %arg1: i32) -> (i32, i32) {
    %c0_i32 = arith.constant 0 : i32
    %c0_i32_0 = arith.constant 0 : i32
    %c0_i32_1 = arith.constant 0 : i32
    return %c0_i32, %c0_i32_0 : i32, i32
  }
  func.func @transform_5(%arg0: i32, %arg1: i32) -> (i32, i32, i32) {
    %c0_i32 = arith.constant 0 : i32
    %c0_i32_0 = arith.constant 0 : i32
    return %arg0, %c0_i32, %arg1 : i32, i32, i32
  }
}

</mosaic_0001>

<llo_original>
// kernel: tpu_custom_call.1
$region0: #{tpu_custom_call.1}
  #allocation0 [shape = 'u32[]', space=smem, size = 0x4, offset = 0x4, fixed_abs, tag = 'smem constant byte address 0x4 - core index']
  #allocation1 [shape = 'u32[72,128]{1,0:T(1,128)}', space=vmem, size = 0x9000, scoped, tag = 'internal scratch']
  %s0 = inlined_call_operand.vmem [shape: f32[2], index: 0, kind: input, shape index: {}]
  %s1 = inlined_call_operand.hbm [shape: f32[2,128,256], index: 1, kind: input, shape index: {}]
  %s2 = inlined_call_operand.hbm [shape: f32[2,128,256], index: 2, kind: input, shape index: {}]
  %s3 = inlined_call_operand.vmem [shape: f32[128,128], index: 3, kind: input, shape index: {}]
  %s4 = inlined_call_operand.vmem [shape: f32[128,1], index: 4, kind: input, shape index: {}]
  %s5 = inlined_call_operand.hbm [shape: f32[2,128,256], index: 5, kind: output, shape index: {}]
  %s6 = sld [smem:[#allocation0]]
  $region65: #{tpu_custom_call.1} parent=0
    _
  %s8 = ssub.s32 1, %s6
  %s9 = scalar_select 0, %s8, %s6
  $region1: #{tpu_custom_call.1} parent=0
    #allocation2 [shape = 'u8[512]{0}', space=smem, size = 0x200, scoped, tag = 'input window, operand 0, single buffered']
    #allocation3 [shape = 's32[2]{0}', space=sflag, size = 0x8, scoped, tag = 'scoped memory for tpu_custom_call.1']
    #allocation4 [shape = 's32[2]{0}', space=sflag, size = 0x8, scoped, tag = 'scoped memory for tpu_custom_call.1']
    #allocation5 [shape = 's32[2]{0}', space=sflag, size = 0x8, scoped, tag = 'scoped memory for tpu_custom_call.1']
    #allocation6 [shape = 'u8[262144]{0}', space=vmem, size = 0x40000, scoped, tag = 'input window, operand 1']
    #allocation7 [shape = 'u8[262144]{0}', space=vmem, size = 0x40000, scoped, tag = 'input window, operand 2']
    #allocation8 [shape = 's32[2]{0}', space=sflag, size = 0x8, scoped, tag = 'scoped memory for tpu_custom_call.1']
    #allocation9 [shape = 'u8[262144]{0}', space=vmem, size = 0x40000, scoped, tag = 'output window, operand 0']
    %10 = vsyncpa [#allocation5], 0
    %11 = vsyncpa [#allocation3], 0
    %s12 = scalar_lea.sflag [#allocation3], 1
    %13 = vsyncpa %s12, 0
    %14 = vsyncpa [#allocation8], 0
    %s15 = scalar_lea.sflag [#allocation8], 1
    %16 = vsyncpa %s15, 0
    %17 = vsyncpa [#allocation4], 0
    %s18 = scalar_lea.sflag [#allocation4], 1
    %19 = vsyncpa %s18, 0
    loop: start=0, step=1, limit=4
    $region2: #{tpu_custom_call.1} parent=1 // loop_pre_header
      _
    $region3: #{tpu_custom_call.1} parent=1 // loop_header
      %s21 = sphi 0, %s25
      %p22 = scmp.ge.s32.totalorder %s21, 4
      %s28 = sphi 0, %s40
      %s29 = sphi 0, %s36
      %s30 = sphi 0, %s28
      %s31 = sphi 0, %s29
      %s32 = sphi 0, %s30
      %s33 = sphi 0, %s31
      %s41 = sphi 0, %s41
      %s43 = sphi 0, %s41
      %s44 = sphi 0, %s43
      %s58 = sphi 0, %s44
      %s66 = sphi 0, %s68
      %s69 = sphi 0, %s66
      %s70 = sphi 0, %s69
      %s86 = sphi 0, %s70
      %s94 = sphi 0, %s96
      %s97 = sphi 0, %s94
      %s98 = sphi 0, %s97
      %s114 = sphi 0, %s98
      %s118 = sphi 0, %s118
      %s120 = sphi 0, %s118
      %s121 = sphi 0, %s120
      %s135 = sphi 0, %s121
      %s139 = sphi 0, %s139
      %s141 = sphi 0, %s139
      %s142 = sphi 0, %s141
      %s156 = sphi 0, %s142
      %s164 = sphi 0, %s166
      %s167 = sphi 0, %s164
      %s168 = sphi 0, %s167
      %s184 = sphi 0, %s168
    $region4: #{tpu_custom_call.1} parent=1 // loop_header_branch
      %24 = sbr.rel (%p22) target = $region8
    $region5: #{tpu_custom_call.1} parent=1 // loop_body
      %s26 = ssub.s32 %s21, 1
      %s27 = ssub.s32 %s21, 2
      %s34 = sadd.s32 1, %s29
      %p35 = scmp.ge.s32.totalorder %s34, 1
      %s36 = scalar_select %p35, 0, %s34
      %s37 = sadd.s32 1, %s28
      %s38 = scalar_select %p35, %s37, %s28
      %p39 = scmp.ge.s32.totalorder %s38, 2
      %s40 = scalar_select %p39, 0, %s38
      %s42 = sadd.s32 %s41, 1
      %p45 = scmp.eq.s32.totalorder %s21, 1
      %p46 = scmp.ne.s32.totalorder %s41, %s43
      %p47 = scmp.eq.s32.totalorder %s21, 0
      %p48 = por %p46, %p47
      %p49 = scmp.ne.s32.totalorder %s41, %s43
      %p50 = scmp.eq.s32.totalorder %s26, 1
      %p51 = por %p49, %p50
      %p52 = scmp.ne.s32.totalorder %s43, %s44
      %p53 = scmp.eq.s32.totalorder %s26, 0
      %p54 = por %p52, %p53
      %p55 = scmp.ne.s32.totalorder %s43, %s44
      %p56 = scmp.eq.s32.totalorder %s27, 1
      %p57 = por %p55, %p56
      %p59 = scmp.ne.s32.totalorder %s44, %s58
      %p60 = scmp.eq.s32.totalorder %s27, 0
      %p61 = por %p59, %p60
      %s62 = ssub.s32 %s28, %s40
      %s63 = ssub.s32 %s29, %s36
      %s64 = sor.u32 %s62, %s63
      %p65 = scmp.eq.s32.totalorder %s64, 0
      %s67 = sadd.s32 %s66, 1
      %s68 = scalar_select %p65, %s66, %s67
      %p71 = pneg %p65
      %p72 = scmp.eq.s32.totalorder %s21, 1
      %p73 = por %p71, %p72
      %p74 = scmp.ne.s32.totalorder %s66, %s69
      %p75 = scmp.eq.s32.totalorder %s21, 0
      %p76 = por %p74, %p75
      %p77 = scmp.ne.s32.totalorder %s66, %s69
      %p78 = scmp.eq.s32.totalorder %s26, 1
      %p79 = por %p77, %p78
      %p80 = scmp.ne.s32.totalorder %s69, %s70
      %p81 = scmp.eq.s32.totalorder %s26, 0
      %p82 = por %p80, %p81
      %p83 = scmp.ne.s32.totalorder %s69, %s70
      %p84 = scmp.eq.s32.totalorder %s27, 1
      %p85 = por %p83, %p84
      %p87 = scmp.ne.s32.totalorder %s70, %s86
      %p88 = scmp.eq.s32.totalorder %s27, 0
      %p89 = por %p87, %p88
      %s90 = ssub.s32 %s28, %s40
      %s91 = ssub.s32 %s29, %s36
      %s92 = sor.u32 %s90, %s91
      %p93 = scmp.eq.s32.totalorder %s92, 0
      %s95 = sadd.s32 %s94, 1
      %s96 = scalar_select %p93, %s94, %s95
      %p99 = pneg %p93
      %p100 = scmp.eq.s32.totalorder %s21, 1
      %p101 = por %p99, %p100
      %p102 = scmp.ne.s32.totalorder %s94, %s97
      %p103 = scmp.eq.s32.totalorder %s21, 0
      %p104 = por %p102, %p103
      %p105 = scmp.ne.s32.totalorder %s94, %s97
      %p106 = scmp.eq.s32.totalorder %s26, 1
      %p107 = por %p105, %p106
      %p108 = scmp.ne.s32.totalorder %s97, %s98
      %p109 = scmp.eq.s32.totalorder %s26, 0
      %p110 = por %p108, %p109
      %p111 = scmp.ne.s32.totalorder %s97, %s98
      %p112 = scmp.eq.s32.totalorder %s27, 1
      %p113 = por %p111, %p112
      %p115 = scmp.ne.s32.totalorder %s98, %s114
      %p116 = scmp.eq.s32.totalorder %s27, 0
      %p117 = por %p115, %p116
      %s119 = sadd.s32 %s118, 1
      %p122 = scmp.eq.s32.totalorder %s21, 1
      %p123 = scmp.ne.s32.totalorder %s118, %s120
      %p124 = scmp.eq.s32.totalorder %s21, 0
      %p125 = por %p123, %p124
      %p126 = scmp.ne.s32.totalorder %s118, %s120
      %p127 = scmp.eq.s32.totalorder %s26, 1
      %p128 = por %p126, %p127
      %p129 = scmp.ne.s32.totalorder %s120, %s121
      %p130 = scmp.eq.s32.totalorder %s26, 0
      %p131 = por %p129, %p130
      %p132 = scmp.ne.s32.totalorder %s120, %s121
      %p133 = scmp.eq.s32.totalorder %s27, 1
      %p134 = por %p132, %p133
      %p136 = scmp.ne.s32.totalorder %s121, %s135
      %p137 = scmp.eq.s32.totalorder %s27, 0
      %p138 = por %p136, %p137
      %s140 = sadd.s32 %s139, 1
      %p143 = scmp.eq.s32.totalorder %s21, 1
      %p144 = scmp.ne.s32.totalorder %s139, %s141
      %p145 = scmp.eq.s32.totalorder %s21, 0
      %p146 = por %p144, %p145
      %p147 = scmp.ne.s32.totalorder %s139, %s141
      %p148 = scmp.eq.s32.totalorder %s26, 1
      %p149 = por %p147, %p148
      %p150 = scmp.ne.s32.totalorder %s141, %s142
      %p151 = scmp.eq.s32.totalorder %s26, 0
      %p152 = por %p150, %p151
      %p153 = scmp.ne.s32.totalorder %s141, %s142
      %p154 = scmp.eq.s32.totalorder %s27, 1
      %p155 = por %p153, %p154
      %p157 = scmp.ne.s32.totalorder %s142, %s156
      %p158 = scmp.eq.s32.totalorder %s27, 0
      %p159 = por %p157, %p158
      %s160 = ssub.s32 %s28, %s40
      %s161 = ssub.s32 %s29, %s36
      %s162 = sor.u32 %s160, %s161
      %p163 = scmp.eq.s32.totalorder %s162, 0
      %s165 = sadd.s32 %s164, 1
      %s166 = scalar_select %p163, %s164, %s165
      %p169 = pneg %p163
      %p170 = scmp.eq.s32.totalorder %s21, 1
      %p171 = por %p169, %p170
      %p172 = scmp.ne.s32.totalorder %s164, %s167
      %p173 = scmp.eq.s32.totalorder %s21, 0
      %p174 = por %p172, %p173
      %p175 = scmp.ne.s32.totalorder %s164, %s167
      %p176 = scmp.eq.s32.totalorder %s26, 1
      %p177 = por %p175, %p176
      %p178 = scmp.ne.s32.totalorder %s167, %s168
      %p179 = scmp.eq.s32.totalorder %s26, 0
      %p180 = por %p178, %p179
      %p181 = scmp.ne.s32.totalorder %s167, %s168
      %p182 = scmp.eq.s32.totalorder %s27, 1
      %p183 = por %p181, %p182
      %p185 = scmp.ne.s32.totalorder %s168, %s184
      %p186 = scmp.eq.s32.totalorder %s27, 0
      %p187 = por %p185, %p186
      %p188 = scmp.le.s32.totalorder 1, %s21
      %p189 = scmp.lt.s32.totalorder %s21, 3
      %p190 = pnand %p188, %p189
      %p191 = pneg %p190
      // Predicated region
      $region9: #{tpu_custom_call.1} parent=5 // pred_check
        _
      $region10: #{tpu_custom_call.1} parent=5 // pred_check_branch
        %193 = sbr.rel (%p190) target = $region12
      $region11: #{tpu_custom_call.1} parent=5 // pred_region
        %s194 = ssub.s32 %s21, 1
        // Predicated region
        $region13: #{tpu_custom_call.1} parent=11 // pred_check
          %p195 = pneg %p54
        $region14: #{tpu_custom_call.1} parent=11 // pred_check_branch
          %197 = sbr.rel (%p195) target = $region16
        $region15: #{tpu_custom_call.1} parent=11 // pred_region
          %199 = vsyncadd [#allocation5], 0
          %s201 = sshll.u32 %s0, 4
          %s202 = int_to_ptr.vmem [resolvable:$true] %s201
          %204 = dma.vmem_to_smem %s202, 16, [#allocation2], [#allocation5]
        $region16: #{tpu_custom_call.1} parent=11 // pred_fallthru
          _
        // Predicated region
        $region17: #{tpu_custom_call.1} parent=11 // pred_check
          %p205 = pneg %p131
        $region18: #{tpu_custom_call.1} parent=11 // pred_check_branch
          %207 = sbr.rel (%p205) target = $region20
        $region19: #{tpu_custom_call.1} parent=11 // pred_region
          _
        $region20: #{tpu_custom_call.1} parent=11 // pred_fallthru
          _
        // Predicated region
        $region21: #{tpu_custom_call.1} parent=11 // pred_check
          %p208 = pneg %p152
        $region22: #{tpu_custom_call.1} parent=11 // pred_check_branch
          %210 = sbr.rel (%p208) target = $region24
        $region23: #{tpu_custom_call.1} parent=11 // pred_region
          _
        $region24: #{tpu_custom_call.1} parent=11 // pred_fallthru
          _
      $region12: #{tpu_custom_call.1} parent=5 // pred_fallthru
        _
      %p211 = scmp.lt.s32.totalorder %s21, 2
      // Predicated region
      $region25: #{tpu_custom_call.1} parent=5 // pred_check
        %p212 = pneg %p211
      $region26: #{tpu_custom_call.1} parent=5 // pred_check_branch
        %214 = sbr.rel (%p212) target = $region28
      $region27: #{tpu_custom_call.1} parent=5 // pred_region
        // Predicated region
        $region29: #{tpu_custom_call.1} parent=27 // pred_check
          %p215 = pneg %p76
        $region30: #{tpu_custom_call.1} parent=27 // pred_check_branch
          %217 = sbr.rel (%p215) target = $region32
        $region31: #{tpu_custom_call.1} parent=27 // pred_region
          %s218 = sand.u32 %s66, 1
          %s219 = scalar_lea.sflag [#allocation3], %s218
          %s220 = sand.u32 %s66, 1
          %s221 = smul.addr %s220, 256
          %s222 = scalar_lea.vmem [#allocation6], %s221
          %s223 = smul.u32 2, %s29
          %225 = vsyncadd %s219, 0
          %s226 = smul.addr %s28, 32
          %s227 = sadd.s32 %s223, %s226
          %s228 = smul.addr %s227, 8
          %s229 = scalar_lea.hbm %s1, %s228
          %s230 = sshll.u32 %s229, 4
          %s231 = int_to_ptr.hbm [resolvable:$true] %s230
          %s232 = sshll.u32 %s222, 4
          %s233 = int_to_ptr.vmem [resolvable:$true] %s232
          %238 = dma.hbm_to_vmem [thread:$0]  %s231, 4096, %s233, %s219, 256, 256, 16
        $region32: #{tpu_custom_call.1} parent=27 // pred_fallthru
          _
        // Predicated region
        $region33: #{tpu_custom_call.1} parent=27 // pred_check
          %p239 = pneg %p104
        $region34: #{tpu_custom_call.1} parent=27 // pred_check_branch
          %241 = sbr.rel (%p239) target = $region36
        $region35: #{tpu_custom_call.1} parent=27 // pred_region
          %s242 = sand.u32 %s94, 1
          %s243 = scalar_lea.sflag [#allocation8], %s242
          %s244 = sand.u32 %s94, 1
          %s245 = smul.addr %s244, 256
          %s246 = scalar_lea.vmem [#allocation7], %s245
          %s247 = smul.u32 2, %s29
          %249 = vsyncadd %s243, 0
          %s250 = smul.addr %s28, 32
          %s251 = sadd.s32 %s247, %s250
          %s252 = smul.addr %s251, 8
          %s253 = scalar_lea.hbm %s2, %s252
          %s254 = sshll.u32 %s253, 4
          %s255 = int_to_ptr.hbm [resolvable:$true] %s254
          %s256 = sshll.u32 %s246, 4
          %s257 = int_to_ptr.vmem [resolvable:$true] %s256
          %262 = dma.hbm_to_vmem [thread:$0]  %s255, 4096, %s257, %s243, 256, 256, 16
        $region36: #{tpu_custom_call.1} parent=27 // pred_fallthru
          _
      $region28: #{tpu_custom_call.1} parent=5 // pred_fallthru
        _
      %p263 = scmp.le.s32.totalorder 1, %s21
      %p264 = scmp.lt.s32.totalorder %s21, 3
      %p265 = pnand %p263, %p264
      %p266 = pneg %p265
      // Predicated region
      $region37: #{tpu_custom_call.1} parent=5 // pred_check
        _
      $region38: #{tpu_custom_call.1} parent=5 // pred_check_branch
        %268 = sbr.rel (%p265) target = $region40
      $region39: #{tpu_custom_call.1} parent=5 // pred_region
        %s269 = ssub.s32 %s21, 1
        // Predicated region
        $region41: #{tpu_custom_call.1} parent=39 // pred_check
          %p270 = pneg %p54
        $region42: #{tpu_custom_call.1} parent=39 // pred_check_branch
          %272 = sbr.rel (%p270) target = $region44
        $region43: #{tpu_custom_call.1} parent=39 // pred_region
          %274 = dma.done [#allocation5], 16
        $region44: #{tpu_custom_call.1} parent=39 // pred_fallthru
          _
        %s275 = sand.u32 %s69, 1
        %s276 = scalar_lea.sflag [#allocation3], %s275
        %s277 = sand.u32 %s69, 1
        %s278 = smul.addr %s277, 256
        %s279 = scalar_lea.vmem [#allocation6], %s278
        // Predicated region
        $region45: #{tpu_custom_call.1} parent=39 // pred_check
          %p280 = pneg %p82
        $region46: #{tpu_custom_call.1} parent=39 // pred_check_branch
          %282 = sbr.rel (%p280) target = $region48
        $region47: #{tpu_custom_call.1} parent=39 // pred_region
          %284 = dma.done %s276, 4096
        $region48: #{tpu_custom_call.1} parent=39 // pred_fallthru
          _
        %s285 = sand.u32 %s97, 1
        %s286 = scalar_lea.sflag [#allocation8], %s285
        %s287 = sand.u32 %s97, 1
        %s288 = smul.addr %s287, 256
        %s289 = scalar_lea.vmem [#allocation7], %s288
        // Predicated region
        $region49: #{tpu_custom_call.1} parent=39 // pred_check
          %p290 = pneg %p110
        $region50: #{tpu_custom_call.1} parent=39 // pred_check_branch
          %292 = sbr.rel (%p290) target = $region52
        $region51: #{tpu_custom_call.1} parent=39 // pred_region
          %294 = dma.done %s286, 4096
        $region52: #{tpu_custom_call.1} parent=39 // pred_fallthru
          _
        %295 = sfence
        %p296 = pneg %p54
        %p297 = pneg %p51
        %s298 = sand.u32 %s69, 1
        %s299 = scalar_lea.sflag [#allocation3], %s298
        %s300 = sand.u32 %s69, 1
        %s301 = smul.addr %s300, 256
        %s302 = scalar_lea.vmem [#allocation6], %s301
        %p303 = pneg %p82
        %p304 = pneg %p79
        %s305 = sand.u32 %s97, 1
        %s306 = scalar_lea.sflag [#allocation8], %s305
        %s307 = sand.u32 %s97, 1
        %s308 = smul.addr %s307, 256
        %s309 = scalar_lea.vmem [#allocation7], %s308
        %p310 = pneg %p110
        %p311 = pneg %p107
        %p312 = pneg %p131
        %p313 = pneg %p128
        %p314 = pneg %p152
        %p315 = pneg %p149
        %p316 = pneg %p180
        %p317 = pneg %p177
        %s318 = sand.u32 %s167, 1
        %s319 = scalar_lea.sflag [#allocation4], %s318
        %s320 = sand.u32 %s167, 1
        %s321 = smul.addr %s320, 256
        %s322 = scalar_lea.vmem [#allocation9], %s321
        %s323 = smul.u32 2, %s31
        %s324 = smul.u32 2, %s31
        %s325 = smul.u32 2, %s31
        %s326 = sld [smem:[#allocation2]]
        %s327 = sld [smem:[#allocation2 + $0x1]]
        %s328 = sadd.f32 %s326, %s327
        %s329 = sadd.f32 %s328, 0.0001
        %v330 = vstv %s329
        %v331 = vrcp.pop %v330
        %v332 = vmul.f32 %v330, %v331
        %v333 = vsub.f32 1.0, %v332
        %v334 = vmul.f32 %v331, %v333
        %v335 = vadd.f32 %v331, %v334
        %vm336 = vweird.f32 %v330
        %vm337 = vweird.f32 %v331
        %vm338 = vmor %vm336, %vm337
        %v339 = vsel %vm338, %v331, %v335
        %v340 = vand.u32 2147483647, %v330
        %vm341 = vcmp.eq.f32.partialorder %v340, 8.507059e+37
        %v342 = vand.u32 %v330, 2147483648
        %v343 = vor.u32 1.1754944e-38, %v342
        %v344 = vsel %vm341, %v343, %v339
        %s345 = vtos %v344
        %s346 = smul.f32 %s326, %s345
        %s347 = smul.f32 %s327, %s345
        %v348 = vld [vmem:[%s279] sm:$0xff]
        %v349 = vld [vmem:[%s279 + $0x8] sm:$0xff]
        %v350 = vld [vmem:[%s279 + $0x10] sm:$0xff]
        %v351 = vld [vmem:[%s279 + $0x18] sm:$0xff]
        %v352 = vld [vmem:[%s279 + $0x20] sm:$0xff]
        %v353 = vld [vmem:[%s279 + $0x28] sm:$0xff]
        %v354 = vld [vmem:[%s279 + $0x30] sm:$0xff]
        %v355 = vld [vmem:[%s279 + $0x38] sm:$0xff]
        %v356 = vld [vmem:[%s279 + $0x40] sm:$0xff]
        %v357 = vld [vmem:[%s279 + $0x48] sm:$0xff]
        %v358 = vld [vmem:[%s279 + $0x50] sm:$0xff]
        %v359 = vld [vmem:[%s279 + $0x58] sm:$0xff]
        %v360 = vld [vmem:[%s279 + $0x60] sm:$0xff]
        %v361 = vld [vmem:[%s279 + $0x68] sm:$0xff]
        %v362 = vld [vmem:[%s279 + $0x70] sm:$0xff]
        %v363 = vld [vmem:[%s279 + $0x78] sm:$0xff]
        %v364 = vld [vmem:[%s279 + $0x80] sm:$0xff]
        %v365 = vld [vmem:[%s279 + $0x88] sm:$0xff]
        %v366 = vld [vmem:[%s279 + $0x90] sm:$0xff]
        %v367 = vld [vmem:[%s279 + $0x98] sm:$0xff]
        %v368 = vld [vmem:[%s279 + $0xa0] sm:$0xff]
        %v369 = vld [vmem:[%s279 + $0xa8] sm:$0xff]
        %v370 = vld [vmem:[%s279 + $0xb0] sm:$0xff]
        %v371 = vld [vmem:[%s279 + $0xb8] sm:$0xff]
        %v372 = vld [vmem:[%s279 + $0xc0] sm:$0xff]
        %v373 = vld [vmem:[%s279 + $0xc8] sm:$0xff]
        %v374 = vld [vmem:[%s279 + $0xd0] sm:$0xff]
        %v375 = vld [vmem:[%s279 + $0xd8] sm:$0xff]
        %v376 = vld [vmem:[%s279 + $0xe0] sm:$0xff]
        %v377 = vld [vmem:[%s279 + $0xe8] sm:$0xff]
        %v378 = vld [vmem:[%s279 + $0xf0] sm:$0xff]
        %v379 = vld [vmem:[%s279 + $0xf8] sm:$0xff]
        %v380 = vstv %s346
        %v381 = vmul.f32 %v380, %v348
        %v382 = vmul.f32 %v380, %v349
        %v383 = vmul.f32 %v380, %v350
        %v384 = vmul.f32 %v380, %v351
        %v385 = vmul.f32 %v380, %v352
        %v386 = vmul.f32 %v380, %v353
        %v387 = vmul.f32 %v380, %v354
        %v388 = vmul.f32 %v380, %v355
        %v389 = vmul.f32 %v380, %v356
        %v390 = vmul.f32 %v380, %v357
        %v391 = vmul.f32 %v380, %v358
        %v392 = vmul.f32 %v380, %v359
        %v393 = vmul.f32 %v380, %v360
        %v394 = vmul.f32 %v380, %v361
        %v395 = vmul.f32 %v380, %v362
        %v396 = vmul.f32 %v380, %v363
        %v397 = vmul.f32 %v380, %v364
        %v398 = vmul.f32 %v380, %v365
        %v399 = vmul.f32 %v380, %v366
        %v400 = vmul.f32 %v380, %v367
        %v401 = vmul.f32 %v380, %v368
        %v402 = vmul.f32 %v380, %v369
        %v403 = vmul.f32 %v380, %v370
        %v404 = vmul.f32 %v380, %v371
        %v405 = vmul.f32 %v380, %v372
        %v406 = vmul.f32 %v380, %v373
        %v407 = vmul.f32 %v380, %v374
        %v408 = vmul.f32 %v380, %v375
        %v409 = vmul.f32 %v380, %v376
        %v410 = vmul.f32 %v380, %v377
        %v411 = vmul.f32 %v380, %v378
        %v412 = vmul.f32 %v380, %v379
        %v413 = vld [vmem:[%s289] sm:$0xff]
        %v414 = vld [vmem:[%s289 + $0x8] sm:$0xff]
        %v415 = vld [vmem:[%s289 + $0x10] sm:$0xff]
        %v416 = vld [vmem:[%s289 + $0x18] sm:$0xff]
        %v417 = vld [vmem:[%s289 + $0x20] sm:$0xff]
        %v418 = vld [vmem:[%s289 + $0x28] sm:$0xff]
        %v419 = vld [vmem:[%s289 + $0x30] sm:$0xff]
        %v420 = vld [vmem:[%s289 + $0x38] sm:$0xff]
        %v421 = vld [vmem:[%s289 + $0x40] sm:$0xff]
        %v422 = vld [vmem:[%s289 + $0x48] sm:$0xff]
        %v423 = vld [vmem:[%s289 + $0x50] sm:$0xff]
        %v424 = vld [vmem:[%s289 + $0x58] sm:$0xff]
        %v425 = vld [vmem:[%s289 + $0x60] sm:$0xff]
        %v426 = vld [vmem:[%s289 + $0x68] sm:$0xff]
        %v427 = vld [vmem:[%s289 + $0x70] sm:$0xff]
        %v428 = vld [vmem:[%s289 + $0x78] sm:$0xff]
        %v429 = vld [vmem:[%s289 + $0x80] sm:$0xff]
        %v430 = vld [vmem:[%s289 + $0x88] sm:$0xff]
        %v431 = vld [vmem:[%s289 + $0x90] sm:$0xff]
        %v432 = vld [vmem:[%s289 + $0x98] sm:$0xff]
        %v433 = vld [vmem:[%s289 + $0xa0] sm:$0xff]
        %v434 = vld [vmem:[%s289 + $0xa8] sm:$0xff]
        %v435 = vld [vmem:[%s289 + $0xb0] sm:$0xff]
        %v436 = vld [vmem:[%s289 + $0xb8] sm:$0xff]
        %v437 = vld [vmem:[%s289 + $0xc0] sm:$0xff]
        %v438 = vld [vmem:[%s289 + $0xc8] sm:$0xff]
        %v439 = vld [vmem:[%s289 + $0xd0] sm:$0xff]
        %v440 = vld [vmem:[%s289 + $0xd8] sm:$0xff]
        %v441 = vld [vmem:[%s289 + $0xe0] sm:$0xff]
        %v442 = vld [vmem:[%s289 + $0xe8] sm:$0xff]
        %v443 = vld [vmem:[%s289 + $0xf0] sm:$0xff]
        %v444 = vld [vmem:[%s289 + $0xf8] sm:$0xff]
        %v445 = vstv %s347
        %v446 = vmul.f32 %v445, %v413
        %v447 = vmul.f32 %v445, %v414
        %v448 = vmul.f32 %v445, %v415
        %v449 = vmul.f32 %v445, %v416
        %v450 = vmul.f32 %v445, %v417
        %v451 = vmul.f32 %v445, %v418
        %v452 = vmul.f32 %v445, %v419
        %v453 = vmul.f32 %v445, %v420
        %v454 = vmul.f32 %v445, %v421
        %v455 = vmul.f32 %v445, %v422
        %v456 = vmul.f32 %v445, %v423
        %v457 = vmul.f32 %v445, %v424
        %v458 = vmul.f32 %v445, %v425
        %v459 = vmul.f32 %v445, %v426
        %v460 = vmul.f32 %v445, %v427
        %v461 = vmul.f32 %v445, %v428
        %v462 = vmul.f32 %v445, %v429
        %v463 = vmul.f32 %v445, %v430
        %v464 = vmul.f32 %v445, %v431
        %v465 = vmul.f32 %v445, %v432
        %v466 = vmul.f32 %v445, %v433
        %v467 = vmul.f32 %v445, %v434
        %v468 = vmul.f32 %v445, %v435
        %v469 = vmul.f32 %v445, %v436
        %v470 = vmul.f32 %v445, %v437
        %v471 = vmul.f32 %v445, %v438
        %v472 = vmul.f32 %v445, %v439
        %v473 = vmul.f32 %v445, %v440
        %v474 = vmul.f32 %v445, %v441
        %v475 = vmul.f32 %v445, %v442
        %v476 = vmul.f32 %v445, %v443
        %v477 = vmul.f32 %v445, %v444
        %v478 = vadd.f32 %v381, %v446
        %v479 = vadd.f32 %v382, %v447
        %v480 = vadd.f32 %v383, %v448
        %v481 = vadd.f32 %v384, %v449
        %v482 = vadd.f32 %v385, %v450
        %v483 = vadd.f32 %v386, %v451
        %v484 = vadd.f32 %v387, %v452
        %v485 = vadd.f32 %v388, %v453
        %v486 = vadd.f32 %v389, %v454
        %v487 = vadd.f32 %v390, %v455
        %v488 = vadd.f32 %v391, %v456
        %v489 = vadd.f32 %v392, %v457
        %v490 = vadd.f32 %v393, %v458
        %v491 = vadd.f32 %v394, %v459
        %v492 = vadd.f32 %v395, %v460
        %v493 = vadd.f32 %v396, %v461
        %v494 = vadd.f32 %v397, %v462
        %v495 = vadd.f32 %v398, %v463
        %v496 = vadd.f32 %v399, %v464
        %v497 = vadd.f32 %v400, %v465
        %v498 = vadd.f32 %v401, %v466
        %v499 = vadd.f32 %v402, %v467
        %v500 = vadd.f32 %v403, %v468
        %v501 = vadd.f32 %v404, %v469
        %v502 = vadd.f32 %v405, %v470
        %v503 = vadd.f32 %v406, %v471
        %v504 = vadd.f32 %v407, %v472
        %v505 = vadd.f32 %v408, %v473
        %v506 = vadd.f32 %v409, %v474
        %v507 = vadd.f32 %v410, %v475
        %v508 = vadd.f32 %v411, %v476
        %v509 = vadd.f32 %v412, %v477
        %v510 = vsub.f32 0.0, %v478
        %v511 = vsub.f32 0.0, %v479
        %v512 = vsub.f32 0.0, %v480
        %v513 = vsub.f32 0.0, %v481
        %v514 = vsub.f32 0.0, %v482
        %v515 = vsub.f32 0.0, %v483
        %v516 = vsub.f32 0.0, %v484
        %v517 = vsub.f32 0.0, %v485
        %v518 = vsub.f32 0.0, %v486
        %v519 = vsub.f32 0.0, %v487
        %v520 = vsub.f32 0.0, %v488
        %v521 = vsub.f32 0.0, %v489
        %v522 = vsub.f32 0.0, %v490
        %v523 = vsub.f32 0.0, %v491
        %v524 = vsub.f32 0.0, %v492
        %v525 = vsub.f32 0.0, %v493
        %v526 = vsub.f32 0.0, %v494
        %v527 = vsub.f32 0.0, %v495
        %v528 = vsub.f32 0.0, %v496
        %v529 = vsub.f32 0.0, %v497
        %v530 = vsub.f32 0.0, %v498
        %v531 = vsub.f32 0.0, %v499
        %v532 = vsub.f32 0.0, %v500
        %v533 = vsub.f32 0.0, %v501
        %v534 = vsub.f32 0.0, %v502
        %v535 = vsub.f32 0.0, %v503
        %v536 = vsub.f32 0.0, %v504
        %v537 = vsub.f32 0.0, %v505
        %v538 = vsub.f32 0.0, %v506
        %v539 = vsub.f32 0.0, %v507
        %v540 = vsub.f32 0.0, %v508
        %v541 = vsub.f32 0.0, %v509
        %v542 = vmul.f32 %v510, 1.442695
        %v543 = vpow.pop %v542
        %v544 = vmul.f32 %v511, 1.442695
        %v545 = vpow.pop %v544
        %v546 = vmul.f32 %v512, 1.442695
        %v547 = vpow.pop %v546
        %v548 = vmul.f32 %v513, 1.442695
        %v549 = vpow.pop %v548
        %v550 = vmul.f32 %v514, 1.442695
        %v551 = vpow.pop %v550
        %v552 = vmul.f32 %v515, 1.442695
        %v553 = vpow.pop %v552
        %v554 = vmul.f32 %v516, 1.442695
        %v555 = vpow.pop %v554
        %v556 = vmul.f32 %v517, 1.442695
        %v557 = vpow.pop %v556
        %v558 = vmul.f32 %v518, 1.442695
        %v559 = vpow.pop %v558
        %v560 = vmul.f32 %v519, 1.442695
        %v561 = vpow.pop %v560
        %v562 = vmul.f32 %v520, 1.442695
        %v563 = vpow.pop %v562
        %v564 = vmul.f32 %v521, 1.442695
        %v565 = vpow.pop %v564
        %v566 = vmul.f32 %v522, 1.442695
        %v567 = vpow.pop %v566
        %v568 = vmul.f32 %v523, 1.442695
        %v569 = vpow.pop %v568
        %v570 = vmul.f32 %v524, 1.442695
        %v571 = vpow.pop %v570
        %v572 = vmul.f32 %v525, 1.442695
        %v573 = vpow.pop %v572
        %v574 = vmul.f32 %v526, 1.442695
        %v575 = vpow.pop %v574
        %v576 = vmul.f32 %v527, 1.442695
        %v577 = vpow.pop %v576
        %v578 = vmul.f32 %v528, 1.442695
        %v579 = vpow.pop %v578
        %v580 = vmul.f32 %v529, 1.442695
        %v581 = vpow.pop %v580
        %v582 = vmul.f32 %v530, 1.442695
        %v583 = vpow.pop %v582
        %v584 = vmul.f32 %v531, 1.442695
        %v585 = vpow.pop %v584
        %v586 = vmul.f32 %v532, 1.442695
        %v587 = vpow.pop %v586
        %v588 = vmul.f32 %v533, 1.442695
        %v589 = vpow.pop %v588
        %v590 = vmul.f32 %v534, 1.442695
        %v591 = vpow.pop %v590
        %v592 = vmul.f32 %v535, 1.442695
        %v593 = vpow.pop %v592
        %v594 = vmul.f32 %v536, 1.442695
        %v595 = vpow.pop %v594
        %v596 = vmul.f32 %v537, 1.442695
        %v597 = vpow.pop %v596
        %v598 = vmul.f32 %v538, 1.442695
        %v599 = vpow.pop %v598
        %v600 = vmul.f32 %v539, 1.442695
        %v601 = vpow.pop %v600
        %v602 = vmul.f32 %v540, 1.442695
        %v603 = vpow.pop %v602
        %v604 = vmul.f32 %v541, 1.442695
        %v605 = vpow.pop %v604
        %v606 = vadd.f32 %v543, 1.0
        %v607 = vadd.f32 %v545, 1.0
        %v608 = vadd.f32 %v547, 1.0
        %v609 = vadd.f32 %v549, 1.0
        %v610 = vadd.f32 %v551, 1.0
        %v611 = vadd.f32 %v553, 1.0
        %v612 = vadd.f32 %v555, 1.0
        %v613 = vadd.f32 %v557, 1.0
        %v614 = vadd.f32 %v559, 1.0
        %v615 = vadd.f32 %v561, 1.0
        %v616 = vadd.f32 %v563, 1.0
        %v617 = vadd.f32 %v565, 1.0
        %v618 = vadd.f32 %v567, 1.0
        %v619 = vadd.f32 %v569, 1.0
        %v620 = vadd.f32 %v571, 1.0
        %v621 = vadd.f32 %v573, 1.0
        %v622 = vadd.f32 %v575, 1.0
        %v623 = vadd.f32 %v577, 1.0
        %v624 = vadd.f32 %v579, 1.0
        %v625 = vadd.f32 %v581, 1.0
        %v626 = vadd.f32 %v583, 1.0
        %v627 = vadd.f32 %v585, 1.0
        %v628 = vadd.f32 %v587, 1.0
        %v629 = vadd.f32 %v589, 1.0
        %v630 = vadd.f32 %v591, 1.0
        %v631 = vadd.f32 %v593, 1.0
        %v632 = vadd.f32 %v595, 1.0
        %v633 = vadd.f32 %v597, 1.0
        %v634 = vadd.f32 %v599, 1.0
        %v635 = vadd.f32 %v601, 1.0
        %v636 = vadd.f32 %v603, 1.0
        %v637 = vadd.f32 %v605, 1.0
        %v638 = vrcp.pop %v606
        %v639 = vmul.f32 %v606, %v638
        %v640 = vsub.f32 1.0, %v639
        %v641 = vmul.f32 %v638, %v640
        %v642 = vadd.f32 %v638, %v641
        %vm643 = vweird.f32 %v606
        %vm644 = vweird.f32 %v638
        %vm645 = vmor %vm643, %vm644
        %v646 = vsel %vm645, %v638, %v642
        %v647 = vand.u32 2147483647, %v606
        %vm648 = vcmp.eq.f32.partialorder %v647, 8.507059e+37
        %v649 = vand.u32 %v606, 2147483648
        %v650 = vor.u32 1.1754944e-38, %v649
        %v651 = vsel %vm648, %v650, %v646
        %v652 = vmul.f32 1.0, %v651
        %v653 = vrcp.pop %v607
        %v654 = vmul.f32 %v607, %v653
        %v655 = vsub.f32 1.0, %v654
        %v656 = vmul.f32 %v653, %v655
        %v657 = vadd.f32 %v653, %v656
        %vm658 = vweird.f32 %v607
        %vm659 = vweird.f32 %v653
        %vm660 = vmor %vm658, %vm659
        %v661 = vsel %vm660, %v653, %v657
        %v662 = vand.u32 2147483647, %v607
        %vm663 = vcmp.eq.f32.partialorder %v662, 8.507059e+37
        %v664 = vand.u32 %v607, 2147483648
        %v665 = vor.u32 1.1754944e-38, %v664
        %v666 = vsel %vm663, %v665, %v661
        %v667 = vmul.f32 1.0, %v666
        %v668 = vrcp.pop %v608
        %v669 = vmul.f32 %v608, %v668
        %v670 = vsub.f32 1.0, %v669
        %v671 = vmul.f32 %v668, %v670
        %v672 = vadd.f32 %v668, %v671
        %vm673 = vweird.f32 %v608
        %vm674 = vweird.f32 %v668
        %vm675 = vmor %vm673, %vm674
        %v676 = vsel %vm675, %v668, %v672
        %v677 = vand.u32 2147483647, %v608
        %vm678 = vcmp.eq.f32.partialorder %v677, 8.507059e+37
        %v679 = vand.u32 %v608, 2147483648
        %v680 = vor.u32 1.1754944e-38, %v679
        %v681 = vsel %vm678, %v680, %v676
        %v682 = vmul.f32 1.0, %v681
        %v683 = vrcp.pop %v609
        %v684 = vmul.f32 %v609, %v683
        %v685 = vsub.f32 1.0, %v684
        %v686 = vmul.f32 %v683, %v685
        %v687 = vadd.f32 %v683, %v686
        %vm688 = vweird.f32 %v609
        %vm689 = vweird.f32 %v683
        %vm690 = vmor %vm688, %vm689
        %v691 = vsel %vm690, %v683, %v687
        %v692 = vand.u32 2147483647, %v609
        %vm693 = vcmp.eq.f32.partialorder %v692, 8.507059e+37
        %v694 = vand.u32 %v609, 2147483648
        %v695 = vor.u32 1.1754944e-38, %v694
        %v696 = vsel %vm693, %v695, %v691
        %v697 = vmul.f32 1.0, %v696
        %v698 = vrcp.pop %v610
        %v699 = vmul.f32 %v610, %v698
        %v700 = vsub.f32 1.0, %v699
        %v701 = vmul.f32 %v698, %v700
        %v702 = vadd.f32 %v698, %v701
        %vm703 = vweird.f32 %v610
        %vm704 = vweird.f32 %v698
        %vm705 = vmor %vm703, %vm704
        %v706 = vsel %vm705, %v698, %v702
        %v707 = vand.u32 2147483647, %v610
        %vm708 = vcmp.eq.f32.partialorder %v707, 8.507059e+37
        %v709 = vand.u32 %v610, 2147483648
        %v710 = vor.u32 1.1754944e-38, %v709
        %v711 = vsel %vm708, %v710, %v706
        %v712 = vmul.f32 1.0, %v711
        %v713 = vrcp.pop %v611
        %v714 = vmul.f32 %v611, %v713
        %v715 = vsub.f32 1.0, %v714
        %v716 = vmul.f32 %v713, %v715
        %v717 = vadd.f32 %v713, %v716
        %vm718 = vweird.f32 %v611
        %vm719 = vweird.f32 %v713
        %vm720 = vmor %vm718, %vm719
        %v721 = vsel %vm720, %v713, %v717
        %v722 = vand.u32 2147483647, %v611
        %vm723 = vcmp.eq.f32.partialorder %v722, 8.507059e+37
        %v724 = vand.u32 %v611, 2147483648
        %v725 = vor.u32 1.1754944e-38, %v724
        %v726 = vsel %vm723, %v725, %v721
        %v727 = vmul.f32 1.0, %v726
        %v728 = vrcp.pop %v612
        %v729 = vmul.f32 %v612, %v728
        %v730 = vsub.f32 1.0, %v729
        %v731 = vmul.f32 %v728, %v730
        %v732 = vadd.f32 %v728, %v731
        %vm733 = vweird.f32 %v612
        %vm734 = vweird.f32 %v728
        %vm735 = vmor %vm733, %vm734
        %v736 = vsel %vm735, %v728, %v732
        %v737 = vand.u32 2147483647, %v612
        %vm738 = vcmp.eq.f32.partialorder %v737, 8.507059e+37
        %v739 = vand.u32 %v612, 2147483648
        %v740 = vor.u32 1.1754944e-38, %v739
        %v741 = vsel %vm738, %v740, %v736
        %v742 = vmul.f32 1.0, %v741
        %v743 = vrcp.pop %v613
        %v744 = vmul.f32 %v613, %v743
        %v745 = vsub.f32 1.0, %v744
        %v746 = vmul.f32 %v743, %v745
        %v747 = vadd.f32 %v743, %v746
        %vm748 = vweird.f32 %v613
        %vm749 = vweird.f32 %v743
        %vm750 = vmor %vm748, %vm749
        %v751 = vsel %vm750, %v743, %v747
        %v752 = vand.u32 2147483647, %v613
        %vm753 = vcmp.eq.f32.partialorder %v752, 8.507059e+37
        %v754 = vand.u32 %v613, 2147483648
        %v755 = vor.u32 1.1754944e-38, %v754
        %v756 = vsel %vm753, %v755, %v751
        %v757 = vmul.f32 1.0, %v756
        %v758 = vrcp.pop %v614
        %v759 = vmul.f32 %v614, %v758
        %v760 = vsub.f32 1.0, %v759
        %v761 = vmul.f32 %v758, %v760
        %v762 = vadd.f32 %v758, %v761
        %vm763 = vweird.f32 %v614
        %vm764 = vweird.f32 %v758
        %vm765 = vmor %vm763, %vm764
        %v766 = vsel %vm765, %v758, %v762
        %v767 = vand.u32 2147483647, %v614
        %vm768 = vcmp.eq.f32.partialorder %v767, 8.507059e+37
        %v769 = vand.u32 %v614, 2147483648
        %v770 = vor.u32 1.1754944e-38, %v769
        %v771 = vsel %vm768, %v770, %v766
        %v772 = vmul.f32 1.0, %v771
        %v773 = vrcp.pop %v615
        %v774 = vmul.f32 %v615, %v773
        %v775 = vsub.f32 1.0, %v774
        %v776 = vmul.f32 %v773, %v775
        %v777 = vadd.f32 %v773, %v776
        %vm778 = vweird.f32 %v615
        %vm779 = vweird.f32 %v773
        %vm780 = vmor %vm778, %vm779
        %v781 = vsel %vm780, %v773, %v777
        %v782 = vand.u32 2147483647, %v615
        %vm783 = vcmp.eq.f32.partialorder %v782, 8.507059e+37
        %v784 = vand.u32 %v615, 2147483648
        %v785 = vor.u32 1.1754944e-38, %v784
        %v786 = vsel %vm783, %v785, %v781
        %v787 = vmul.f32 1.0, %v786
        %v788 = vrcp.pop %v616
        %v789 = vmul.f32 %v616, %v788
        %v790 = vsub.f32 1.0, %v789
        %v791 = vmul.f32 %v788, %v790
        %v792 = vadd.f32 %v788, %v791
        %vm793 = vweird.f32 %v616
        %vm794 = vweird.f32 %v788
        %vm795 = vmor %vm793, %vm794
        %v796 = vsel %vm795, %v788, %v792
        %v797 = vand.u32 2147483647, %v616
        %vm798 = vcmp.eq.f32.partialorder %v797, 8.507059e+37
        %v799 = vand.u32 %v616, 2147483648
        %v800 = vor.u32 1.1754944e-38, %v799
        %v801 = vsel %vm798, %v800, %v796
        %v802 = vmul.f32 1.0, %v801
        %v803 = vrcp.pop %v617
        %v804 = vmul.f32 %v617, %v803
        %v805 = vsub.f32 1.0, %v804
        %v806 = vmul.f32 %v803, %v805
        %v807 = vadd.f32 %v803, %v806
        %vm808 = vweird.f32 %v617
        %vm809 = vweird.f32 %v803
        %vm810 = vmor %vm808, %vm809
        %v811 = vsel %vm810, %v803, %v807
        %v812 = vand.u32 2147483647, %v617
        %vm813 = vcmp.eq.f32.partialorder %v812, 8.507059e+37
        %v814 = vand.u32 %v617, 2147483648
        %v815 = vor.u32 1.1754944e-38, %v814
        %v816 = vsel %vm813, %v815, %v811
        %v817 = vmul.f32 1.0, %v816
        %v818 = vrcp.pop %v618
        %v819 = vmul.f32 %v618, %v818
        %v820 = vsub.f32 1.0, %v819
        %v821 = vmul.f32 %v818, %v820
        %v822 = vadd.f32 %v818, %v821
        %vm823 = vweird.f32 %v618
        %vm824 = vweird.f32 %v818
        %vm825 = vmor %vm823, %vm824
        %v826 = vsel %vm825, %v818, %v822
        %v827 = vand.u32 2147483647, %v618
        %vm828 = vcmp.eq.f32.partialorder %v827, 8.507059e+37
        %v829 = vand.u32 %v618, 2147483648
        %v830 = vor.u32 1.1754944e-38, %v829
        %v831 = vsel %vm828, %v830, %v826
        %v832 = vmul.f32 1.0, %v831
        %v833 = vrcp.pop %v619
        %v834 = vmul.f32 %v619, %v833
        %v835 = vsub.f32 1.0, %v834
        %v836 = vmul.f32 %v833, %v835
        %v837 = vadd.f32 %v833, %v836
        %vm838 = vweird.f32 %v619
        %vm839 = vweird.f32 %v833
        %vm840 = vmor %vm838, %vm839
        %v841 = vsel %vm840, %v833, %v837
        %v842 = vand.u32 2147483647, %v619
        %vm843 = vcmp.eq.f32.partialorder %v842, 8.507059e+37
        %v844 = vand.u32 %v619, 2147483648
        %v845 = vor.u32 1.1754944e-38, %v844
        %v846 = vsel %vm843, %v845, %v841
        %v847 = vmul.f32 1.0, %v846
        %v848 = vrcp.pop %v620
        %v849 = vmul.f32 %v620, %v848
        %v850 = vsub.f32 1.0, %v849
        %v851 = vmul.f32 %v848, %v850
        %v852 = vadd.f32 %v848, %v851
        %vm853 = vweird.f32 %v620
        %vm854 = vweird.f32 %v848
        %vm855 = vmor %vm853, %vm854
        %v856 = vsel %vm855, %v848, %v852
        %v857 = vand.u32 2147483647, %v620
        %vm858 = vcmp.eq.f32.partialorder %v857, 8.507059e+37
        %v859 = vand.u32 %v620, 2147483648
        %v860 = vor.u32 1.1754944e-38, %v859
        %v861 = vsel %vm858, %v860, %v856
        %v862 = vmul.f32 1.0, %v861
        %v863 = vrcp.pop %v621
        %v864 = vmul.f32 %v621, %v863
        %v865 = vsub.f32 1.0, %v864
        %v866 = vmul.f32 %v863, %v865
        %v867 = vadd.f32 %v863, %v866
        %vm868 = vweird.f32 %v621
        %vm869 = vweird.f32 %v863
        %vm870 = vmor %vm868, %vm869
        %v871 = vsel %vm870, %v863, %v867
        %v872 = vand.u32 2147483647, %v621
        %vm873 = vcmp.eq.f32.partialorder %v872, 8.507059e+37
        %v874 = vand.u32 %v621, 2147483648
        %v875 = vor.u32 1.1754944e-38, %v874
        %v876 = vsel %vm873, %v875, %v871
        %v877 = vmul.f32 1.0, %v876
        %v878 = vrcp.pop %v622
        %v879 = vmul.f32 %v622, %v878
        %v880 = vsub.f32 1.0, %v879
        %v881 = vmul.f32 %v878, %v880
        %v882 = vadd.f32 %v878, %v881
        %vm883 = vweird.f32 %v622
        %vm884 = vweird.f32 %v878
        %vm885 = vmor %vm883, %vm884
        %v886 = vsel %vm885, %v878, %v882
        %v887 = vand.u32 2147483647, %v622
        %vm888 = vcmp.eq.f32.partialorder %v887, 8.507059e+37
        %v889 = vand.u32 %v622, 2147483648
        %v890 = vor.u32 1.1754944e-38, %v889
        %v891 = vsel %vm888, %v890, %v886
        %v892 = vmul.f32 1.0, %v891
        %v893 = vrcp.pop %v623
        %v894 = vmul.f32 %v623, %v893
        %v895 = vsub.f32 1.0, %v894
        %v896 = vmul.f32 %v893, %v895
        %v897 = vadd.f32 %v893, %v896
        %vm898 = vweird.f32 %v623
        %vm899 = vweird.f32 %v893
        %vm900 = vmor %vm898, %vm899
        %v901 = vsel %vm900, %v893, %v897
        %v902 = vand.u32 2147483647, %v623
        %vm903 = vcmp.eq.f32.partialorder %v902, 8.507059e+37
        %v904 = vand.u32 %v623, 2147483648
        %v905 = vor.u32 1.1754944e-38, %v904
        %v906 = vsel %vm903, %v905, %v901
        %v907 = vmul.f32 1.0, %v906
        %v908 = vrcp.pop %v624
        %v909 = vmul.f32 %v624, %v908
        %v910 = vsub.f32 1.0, %v909
        %v911 = vmul.f32 %v908, %v910
        %v912 = vadd.f32 %v908, %v911
        %vm913 = vweird.f32 %v624
        %vm914 = vweird.f32 %v908
        %vm915 = vmor %vm913, %vm914
        %v916 = vsel %vm915, %v908, %v912
        %v917 = vand.u32 2147483647, %v624
        %vm918 = vcmp.eq.f32.partialorder %v917, 8.507059e+37
        %v919 = vand.u32 %v624, 2147483648
        %v920 = vor.u32 1.1754944e-38, %v919
        %v921 = vsel %vm918, %v920, %v916
        %v922 = vmul.f32 1.0, %v921
        %v923 = vrcp.pop %v625
        %v924 = vmul.f32 %v625, %v923
        %v925 = vsub.f32 1.0, %v924
        %v926 = vmul.f32 %v923, %v925
        %v927 = vadd.f32 %v923, %v926
        %vm928 = vweird.f32 %v625
        %vm929 = vweird.f32 %v923
        %vm930 = vmor %vm928, %vm929
        %v931 = vsel %vm930, %v923, %v927
        %v932 = vand.u32 2147483647, %v625
        %vm933 = vcmp.eq.f32.partialorder %v932, 8.507059e+37
        %v934 = vand.u32 %v625, 2147483648
        %v935 = vor.u32 1.1754944e-38, %v934
        %v936 = vsel %vm933, %v935, %v931
        %v937 = vmul.f32 1.0, %v936
        %v938 = vrcp.pop %v626
        %v939 = vmul.f32 %v626, %v938
        %v940 = vsub.f32 1.0, %v939
        %v941 = vmul.f32 %v938, %v940
        %v942 = vadd.f32 %v938, %v941
        %vm943 = vweird.f32 %v626
        %vm944 = vweird.f32 %v938
        %vm945 = vmor %vm943, %vm944
        %v946 = vsel %vm945, %v938, %v942
        %v947 = vand.u32 2147483647, %v626
        %vm948 = vcmp.eq.f32.partialorder %v947, 8.507059e+37
        %v949 = vand.u32 %v626, 2147483648
        %v950 = vor.u32 1.1754944e-38, %v949
        %v951 = vsel %vm948, %v950, %v946
        %v952 = vmul.f32 1.0, %v951
        %v953 = vrcp.pop %v627
        %v954 = vmul.f32 %v627, %v953
        %v955 = vsub.f32 1.0, %v954
        %v956 = vmul.f32 %v953, %v955
        %v957 = vadd.f32 %v953, %v956
        %vm958 = vweird.f32 %v627
        %vm959 = vweird.f32 %v953
        %vm960 = vmor %vm958, %vm959
        %v961 = vsel %vm960, %v953, %v957
        %v962 = vand.u32 2147483647, %v627
        %vm963 = vcmp.eq.f32.partialorder %v962, 8.507059e+37
        %v964 = vand.u32 %v627, 2147483648
        %v965 = vor.u32 1.1754944e-38, %v964
        %v966 = vsel %vm963, %v965, %v961
        %v967 = vmul.f32 1.0, %v966
        %v968 = vrcp.pop %v628
        %v969 = vmul.f32 %v628, %v968
        %v970 = vsub.f32 1.0, %v969
        %v971 = vmul.f32 %v968, %v970
        %v972 = vadd.f32 %v968, %v971
        %vm973 = vweird.f32 %v628
        %vm974 = vweird.f32 %v968
        %vm975 = vmor %vm973, %vm974
        %v976 = vsel %vm975, %v968, %v972
        %v977 = vand.u32 2147483647, %v628
        %vm978 = vcmp.eq.f32.partialorder %v977, 8.507059e+37
        %v979 = vand.u32 %v628, 2147483648
        %v980 = vor.u32 1.1754944e-38, %v979
        %v981 = vsel %vm978, %v980, %v976
        %v982 = vmul.f32 1.0, %v981
        %v983 = vrcp.pop %v629
        %v984 = vmul.f32 %v629, %v983
        %v985 = vsub.f32 1.0, %v984
        %v986 = vmul.f32 %v983, %v985
        %v987 = vadd.f32 %v983, %v986
        %vm988 = vweird.f32 %v629
        %vm989 = vweird.f32 %v983
        %vm990 = vmor %vm988, %vm989
        %v991 = vsel %vm990, %v983, %v987
        %v992 = vand.u32 2147483647, %v629
        %vm993 = vcmp.eq.f32.partialorder %v992, 8.507059e+37
        %v994 = vand.u32 %v629, 2147483648
        %v995 = vor.u32 1.1754944e-38, %v994
        %v996 = vsel %vm993, %v995, %v991
        %v997 = vmul.f32 1.0, %v996
        %v998 = vrcp.pop %v630
        %v999 = vmul.f32 %v630, %v998
        %v1000 = vsub.f32 1.0, %v999
        %v1001 = vmul.f32 %v998, %v1000
        %v1002 = vadd.f32 %v998, %v1001
        %vm1003 = vweird.f32 %v630
        %vm1004 = vweird.f32 %v998
        %vm1005 = vmor %vm1003, %vm1004
        %v1006 = vsel %vm1005, %v998, %v1002
        %v1007 = vand.u32 2147483647, %v630
        %vm1008 = vcmp.eq.f32.partialorder %v1007, 8.507059e+37
        %v1009 = vand.u32 %v630, 2147483648
        %v1010 = vor.u32 1.1754944e-38, %v1009
        %v1011 = vsel %vm1008, %v1010, %v1006
        %v1012 = vmul.f32 1.0, %v1011
        %v1013 = vrcp.pop %v631
        %v1014 = vmul.f32 %v631, %v1013
        %v1015 = vsub.f32 1.0, %v1014
        %v1016 = vmul.f32 %v1013, %v1015
        %v1017 = vadd.f32 %v1013, %v1016
        %vm1018 = vweird.f32 %v631
        %vm1019 = vweird.f32 %v1013
        %vm1020 = vmor %vm1018, %vm1019
        %v1021 = vsel %vm1020, %v1013, %v1017
        %v1022 = vand.u32 2147483647, %v631
        %vm1023 = vcmp.eq.f32.partialorder %v1022, 8.507059e+37
        %v1024 = vand.u32 %v631, 2147483648
        %v1025 = vor.u32 1.1754944e-38, %v1024
        %v1026 = vsel %vm1023, %v1025, %v1021
        %v1027 = vmul.f32 1.0, %v1026
        %v1028 = vrcp.pop %v632
        %v1029 = vmul.f32 %v632, %v1028
        %v1030 = vsub.f32 1.0, %v1029
        %v1031 = vmul.f32 %v1028, %v1030
        %v1032 = vadd.f32 %v1028, %v1031
        %vm1033 = vweird.f32 %v632
        %vm1034 = vweird.f32 %v1028
        %vm1035 = vmor %vm1033, %vm1034
        %v1036 = vsel %vm1035, %v1028, %v1032
        %v1037 = vand.u32 2147483647, %v632
        %vm1038 = vcmp.eq.f32.partialorder %v1037, 8.507059e+37
        %v1039 = vand.u32 %v632, 2147483648
        %v1040 = vor.u32 1.1754944e-38, %v1039
        %v1041 = vsel %vm1038, %v1040, %v1036
        %v1042 = vmul.f32 1.0, %v1041
        %v1043 = vrcp.pop %v633
        %v1044 = vmul.f32 %v633, %v1043
        %v1045 = vsub.f32 1.0, %v1044
        %v1046 = vmul.f32 %v1043, %v1045
        %v1047 = vadd.f32 %v1043, %v1046
        %vm1048 = vweird.f32 %v633
        %vm1049 = vweird.f32 %v1043
        %vm1050 = vmor %vm1048, %vm1049
        %v1051 = vsel %vm1050, %v1043, %v1047
        %v1052 = vand.u32 2147483647, %v633
        %vm1053 = vcmp.eq.f32.partialorder %v1052, 8.507059e+37
        %v1054 = vand.u32 %v633, 2147483648
        %v1055 = vor.u32 1.1754944e-38, %v1054
        %v1056 = vsel %vm1053, %v1055, %v1051
        %v1057 = vmul.f32 1.0, %v1056
        %v1058 = vrcp.pop %v634
        %v1059 = vmul.f32 %v634, %v1058
        %v1060 = vsub.f32 1.0, %v1059
        %v1061 = vmul.f32 %v1058, %v1060
        %v1062 = vadd.f32 %v1058, %v1061
        %vm1063 = vweird.f32 %v634
        %vm1064 = vweird.f32 %v1058
        %vm1065 = vmor %vm1063, %vm1064
        %v1066 = vsel %vm1065, %v1058, %v1062
        %v1067 = vand.u32 2147483647, %v634
        %vm1068 = vcmp.eq.f32.partialorder %v1067, 8.507059e+37
        %v1069 = vand.u32 %v634, 2147483648
        %v1070 = vor.u32 1.1754944e-38, %v1069
        %v1071 = vsel %vm1068, %v1070, %v1066
        %v1072 = vmul.f32 1.0, %v1071
        %v1073 = vrcp.pop %v635
        %v1074 = vmul.f32 %v635, %v1073
        %v1075 = vsub.f32 1.0, %v1074
        %v1076 = vmul.f32 %v1073, %v1075
        %v1077 = vadd.f32 %v1073, %v1076
        %vm1078 = vweird.f32 %v635
        %vm1079 = vweird.f32 %v1073
        %vm1080 = vmor %vm1078, %vm1079
        %v1081 = vsel %vm1080, %v1073, %v1077
        %v1082 = vand.u32 2147483647, %v635
        %vm1083 = vcmp.eq.f32.partialorder %v1082, 8.507059e+37
        %v1084 = vand.u32 %v635, 2147483648
        %v1085 = vor.u32 1.1754944e-38, %v1084
        %v1086 = vsel %vm1083, %v1085, %v1081
        %v1087 = vmul.f32 1.0, %v1086
        %v1088 = vrcp.pop %v636
        %v1089 = vmul.f32 %v636, %v1088
        %v1090 = vsub.f32 1.0, %v1089
        %v1091 = vmul.f32 %v1088, %v1090
        %v1092 = vadd.f32 %v1088, %v1091
        %vm1093 = vweird.f32 %v636
        %vm1094 = vweird.f32 %v1088
        %vm1095 = vmor %vm1093, %vm1094
        %v1096 = vsel %vm1095, %v1088, %v1092
        %v1097 = vand.u32 2147483647, %v636
        %vm1098 = vcmp.eq.f32.partialorder %v1097, 8.507059e+37
        %v1099 = vand.u32 %v636, 2147483648
        %v1100 = vor.u32 1.1754944e-38, %v1099
        %v1101 = vsel %vm1098, %v1100, %v1096
        %v1102 = vmul.f32 1.0, %v1101
        %v1103 = vrcp.pop %v637
        %v1104 = vmul.f32 %v637, %v1103
        %v1105 = vsub.f32 1.0, %v1104
        %v1106 = vmul.f32 %v1103, %v1105
        %v1107 = vadd.f32 %v1103, %v1106
        %vm1108 = vweird.f32 %v637
        %vm1109 = vweird.f32 %v1103
        %vm1110 = vmor %vm1108, %vm1109
        %v1111 = vsel %vm1110, %v1103, %v1107
        %v1112 = vand.u32 2147483647, %v637
        %vm1113 = vcmp.eq.f32.partialorder %v1112, 8.507059e+37
        %v1114 = vand.u32 %v637, 2147483648
        %v1115 = vor.u32 1.1754944e-38, %v1114
        %v1116 = vsel %vm1113, %v1115, %v1111
        %v1117 = vmul.f32 1.0, %v1116
        %v1118 = vmul.f32 %v478, %v652
        %v1119 = vmul.f32 %v479, %v667
        %v1120 = vmul.f32 %v480, %v682
        %v1121 = vmul.f32 %v481, %v697
        %v1122 = vmul.f32 %v482, %v712
        %v1123 = vmul.f32 %v483, %v727
        %v1124 = vmul.f32 %v484, %v742
        %v1125 = vmul.f32 %v485, %v757
        %v1126 = vmul.f32 %v486, %v772
        %v1127 = vmul.f32 %v487, %v787
        %v1128 = vmul.f32 %v488, %v802
        %v1129 = vmul.f32 %v489, %v817
        %v1130 = vmul.f32 %v490, %v832
        %v1131 = vmul.f32 %v491, %v847
        %v1132 = vmul.f32 %v492, %v862
        %v1133 = vmul.f32 %v493, %v877
        %v1134 = vmul.f32 %v494, %v892
        %v1135 = vmul.f32 %v495, %v907
        %v1136 = vmul.f32 %v496, %v922
        %v1137 = vmul.f32 %v497, %v937
        %v1138 = vmul.f32 %v498, %v952
        %v1139 = vmul.f32 %v499, %v967
        %v1140 = vmul.f32 %v500, %v982
        %v1141 = vmul.f32 %v501, %v997
        %v1142 = vmul.f32 %v502, %v1012
        %v1143 = vmul.f32 %v503, %v1027
        %v1144 = vmul.f32 %v504, %v1042
        %v1145 = vmul.f32 %v505, %v1057
        %v1146 = vmul.f32 %v506, %v1072
        %v1147 = vmul.f32 %v507, %v1087
        %v1148 = vmul.f32 %v508, %v1102
        %v1149 = vmul.f32 %v509, %v1117
        %v1150 = vld [vmem:[%s3] sm:$0xff]
        %v1151 = vld [vmem:[%s3 + $0x8] sm:$0xff]
        %v1152 = vld [vmem:[%s3 + $0x10] sm:$0xff]
        %v1153 = vld [vmem:[%s3 + $0x18] sm:$0xff]
        %v1154 = vld [vmem:[%s3 + $0x20] sm:$0xff]
        %v1155 = vld [vmem:[%s3 + $0x28] sm:$0xff]
        %v1156 = vld [vmem:[%s3 + $0x30] sm:$0xff]
        %v1157 = vld [vmem:[%s3 + $0x38] sm:$0xff]
        %v1158 = vld [vmem:[%s3 + $0x40] sm:$0xff]
        %v1159 = vld [vmem:[%s3 + $0x48] sm:$0xff]
        %v1160 = vld [vmem:[%s3 + $0x50] sm:$0xff]
        %v1161 = vld [vmem:[%s3 + $0x58] sm:$0xff]
        %v1162 = vld [vmem:[%s3 + $0x60] sm:$0xff]
        %v1163 = vld [vmem:[%s3 + $0x68] sm:$0xff]
        %v1164 = vld [vmem:[%s3 + $0x70] sm:$0xff]
        %v1165 = vld [vmem:[%s3 + $0x78] sm:$0xff]
        %v1166 = vld [vmem:[%s4] sm:$0xff]
        %v1167 = vld [vmem:[%s4 + $0x8] sm:$0xff]
        %v1168 = vld [vmem:[%s4 + $0x10] sm:$0xff]
        %v1169 = vld [vmem:[%s4 + $0x18] sm:$0xff]
        %v1170 = vld [vmem:[%s4 + $0x20] sm:$0xff]
        %v1171 = vld [vmem:[%s4 + $0x28] sm:$0xff]
        %v1172 = vld [vmem:[%s4 + $0x30] sm:$0xff]
        %v1173 = vld [vmem:[%s4 + $0x38] sm:$0xff]
        %v1174 = vld [vmem:[%s4 + $0x40] sm:$0xff]
        %v1175 = vld [vmem:[%s4 + $0x48] sm:$0xff]
        %v1176 = vld [vmem:[%s4 + $0x50] sm:$0xff]
        %v1177 = vld [vmem:[%s4 + $0x58] sm:$0xff]
        %v1178 = vld [vmem:[%s4 + $0x60] sm:$0xff]
        %v1179 = vld [vmem:[%s4 + $0x68] sm:$0xff]
        %v1180 = vld [vmem:[%s4 + $0x70] sm:$0xff]
        %v1181 = vld [vmem:[%s4 + $0x78] sm:$0xff]
        %1183 = vset.pattern.permute.xlu0 0
        %1184 = vperm.xlu0 %1183, %v1166
        %v1185 = vpop.permute.xlu0 %1184
        %1188 = vset.pattern.permute.xlu0 0
        %1189 = vperm.xlu0 %1188, %v1167
        %v1190 = vpop.permute.xlu0 %1189
        %1193 = vset.pattern.permute.xlu0 0
        %1194 = vperm.xlu0 %1193, %v1168
        %v1195 = vpop.permute.xlu0 %1194
        %1198 = vset.pattern.permute.xlu0 0
        %1199 = vperm.xlu0 %1198, %v1169
        %v1200 = vpop.permute.xlu0 %1199
        %1203 = vset.pattern.permute.xlu0 0
        %1204 = vperm.xlu0 %1203, %v1170
        %v1205 = vpop.permute.xlu0 %1204
        %1208 = vset.pattern.permute.xlu0 0
        %1209 = vperm.xlu0 %1208, %v1171
        %v1210 = vpop.permute.xlu0 %1209
        %1213 = vset.pattern.permute.xlu0 0
        %1214 = vperm.xlu0 %1213, %v1172
        %v1215 = vpop.permute.xlu0 %1214
        %1218 = vset.pattern.permute.xlu0 0
        %1219 = vperm.xlu0 %1218, %v1173
        %v1220 = vpop.permute.xlu0 %1219
        %1223 = vset.pattern.permute.xlu0 0
        %1224 = vperm.xlu0 %1223, %v1174
        %v1225 = vpop.permute.xlu0 %1224
        %1228 = vset.pattern.permute.xlu0 0
        %1229 = vperm.xlu0 %1228, %v1175
        %v1230 = vpop.permute.xlu0 %1229
        %1233 = vset.pattern.permute.xlu0 0
        %1234 = vperm.xlu0 %1233, %v1176
        %v1235 = vpop.permute.xlu0 %1234
        %1238 = vset.pattern.permute.xlu0 0
        %1239 = vperm.xlu0 %1238, %v1177
        %v1240 = vpop.permute.xlu0 %1239
        %1243 = vset.pattern.permute.xlu0 0
        %1244 = vperm.xlu0 %1243, %v1178
        %v1245 = vpop.permute.xlu0 %1244
        %1248 = vset.pattern.permute.xlu0 0
        %1249 = vperm.xlu0 %1248, %v1179
        %v1250 = vpop.permute.xlu0 %1249
        %1253 = vset.pattern.permute.xlu0 0
        %1254 = vperm.xlu0 %1253, %v1180
        %v1255 = vpop.permute.xlu0 %1254
        %1258 = vset.pattern.permute.xlu0 0
        %1259 = vperm.xlu0 %1258, %v1181
        %v1260 = vpop.permute.xlu0 %1259
        %1262 = vmatpush.msra.mxu0 %v1148
        %1263 = vmatpush.msra.mxu0 %v1146
        %1264 = vmatpush.msra.mxu0 %v1144
        %1265 = vmatpush.msra.mxu0 %v1142
        %1266 = vmatpush.msra.mxu0 %v1140
        %1267 = vmatpush.msra.mxu0 %v1138
        %1268 = vmatpush.msra.mxu0 %v1136
        %1269 = vmatpush.msra.mxu0 %v1134
        %1270 = vmatpush.msra.mxu0 %v1132
        %1271 = vmatpush.msra.mxu0 %v1130
        %1272 = vmatpush.msra.mxu0 %v1128
        %1273 = vmatpush.msra.mxu0 %v1126
        %1274 = vmatpush.msra.mxu0 %v1124
        %1275 = vmatpush.msra.mxu0 %v1122
        %1276 = vmatpush.msra.mxu0 %v1120
        %1277 = vmatpush.msra.mxu0 %v1118
        %1278 = vmatmul.f32.gmra.mxu0 %v1150
        %v1279 = vpop.f32.mrf.mxu0
        %v1280 = vadd.f32 %v1185, %v1279
        %1281 = vmatmul.f32.gmra.mxu0 %v1151
        %v1282 = vpop.f32.mrf.mxu0
        %v1283 = vadd.f32 %v1190, %v1282
        %1284 = vmatmul.f32.gmra.mxu0 %v1152
        %v1285 = vpop.f32.mrf.mxu0
        %v1286 = vadd.f32 %v1195, %v1285
        %1287 = vmatmul.f32.gmra.mxu0 %v1153
        %v1288 = vpop.f32.mrf.mxu0
        %v1289 = vadd.f32 %v1200, %v1288
        %1290 = vmatmul.f32.gmra.mxu0 %v1154
        %v1291 = vpop.f32.mrf.mxu0
        %v1292 = vadd.f32 %v1205, %v1291
        %1293 = vmatmul.f32.gmra.mxu0 %v1155
        %v1294 = vpop.f32.mrf.mxu0
        %v1295 = vadd.f32 %v1210, %v1294
        %1296 = vmatmul.f32.gmra.mxu0 %v1156
        %v1297 = vpop.f32.mrf.mxu0
        %v1298 = vadd.f32 %v1215, %v1297
        %1299 = vmatmul.f32.gmra.mxu0 %v1157
        %v1300 = vpop.f32.mrf.mxu0
        %v1301 = vadd.f32 %v1220, %v1300
        %1302 = vmatmul.f32.gmra.mxu0 %v1158
        %v1303 = vpop.f32.mrf.mxu0
        %v1304 = vadd.f32 %v1225, %v1303
        %1305 = vmatmul.f32.gmra.mxu0 %v1159
        %v1306 = vpop.f32.mrf.mxu0
        %v1307 = vadd.f32 %v1230, %v1306
        %1308 = vmatmul.f32.gmra.mxu0 %v1160
        %v1309 = vpop.f32.mrf.mxu0
        %v1310 = vadd.f32 %v1235, %v1309
        %1311 = vmatmul.f32.gmra.mxu0 %v1161
        %v1312 = vpop.f32.mrf.mxu0
        %v1313 = vadd.f32 %v1240, %v1312
        %1314 = vmatmul.f32.gmra.mxu0 %v1162
        %v1315 = vpop.f32.mrf.mxu0
        %v1316 = vadd.f32 %v1245, %v1315
        %1317 = vmatmul.f32.gmra.mxu0 %v1163
        %v1318 = vpop.f32.mrf.mxu0
        %v1319 = vadd.f32 %v1250, %v1318
        %1320 = vmatmul.f32.gmra.mxu0 %v1164
        %v1321 = vpop.f32.mrf.mxu0
        %v1322 = vadd.f32 %v1255, %v1321
        %1323 = vmatmul.f32.gmra.mxu0 %v1165
        %v1324 = vpop.f32.mrf.mxu0
        %v1325 = vadd.f32 %v1260, %v1324
        %1326 = vdwg.mxu0
        %1327 = vmatpush.msra.mxu0 %v1149
        %1328 = vmatpush.msra.mxu0 %v1147
        %1329 = vmatpush.msra.mxu0 %v1145
        %1330 = vmatpush.msra.mxu0 %v1143
        %1331 = vmatpush.msra.mxu0 %v1141
        %1332 = vmatpush.msra.mxu0 %v1139
        %1333 = vmatpush.msra.mxu0 %v1137
        %1334 = vmatpush.msra.mxu0 %v1135
        %1335 = vmatpush.msra.mxu0 %v1133
        %1336 = vmatpush.msra.mxu0 %v1131
        %1337 = vmatpush.msra.mxu0 %v1129
        %1338 = vmatpush.msra.mxu0 %v1127
        %1339 = vmatpush.msra.mxu0 %v1125
        %1340 = vmatpush.msra.mxu0 %v1123
        %1341 = vmatpush.msra.mxu0 %v1121
        %1342 = vmatpush.msra.mxu0 %v1119
        %1343 = vmatmul.f32.gmra.mxu0 %v1150
        %v1344 = vpop.f32.mrf.mxu0
        %v1345 = vadd.f32 %v1185, %v1344
        %1346 = vmatmul.f32.gmra.mxu0 %v1151
        %v1347 = vpop.f32.mrf.mxu0
        %v1348 = vadd.f32 %v1190, %v1347
        %1349 = vmatmul.f32.gmra.mxu0 %v1152
        %v1350 = vpop.f32.mrf.mxu0
        %v1351 = vadd.f32 %v1195, %v1350
        %1352 = vmatmul.f32.gmra.mxu0 %v1153
        %v1353 = vpop.f32.mrf.mxu0
        %v1354 = vadd.f32 %v1200, %v1353
        %1355 = vmatmul.f32.gmra.mxu0 %v1154
        %v1356 = vpop.f32.mrf.mxu0
        %v1357 = vadd.f32 %v1205, %v1356
        %1358 = vmatmul.f32.gmra.mxu0 %v1155
        %v1359 = vpop.f32.mrf.mxu0
        %v1360 = vadd.f32 %v1210, %v1359
        %1361 = vmatmul.f32.gmra.mxu0 %v1156
        %v1362 = vpop.f32.mrf.mxu0
        %v1363 = vadd.f32 %v1215, %v1362
        %1364 = vmatmul.f32.gmra.mxu0 %v1157
        %v1365 = vpop.f32.mrf.mxu0
        %v1366 = vadd.f32 %v1220, %v1365
        %1367 = vmatmul.f32.gmra.mxu0 %v1158
        %v1368 = vpop.f32.mrf.mxu0
        %v1369 = vadd.f32 %v1225, %v1368
        %1370 = vmatmul.f32.gmra.mxu0 %v1159
        %v1371 = vpop.f32.mrf.mxu0
        %v1372 = vadd.f32 %v1230, %v1371
        %1373 = vmatmul.f32.gmra.mxu0 %v1160
        %v1374 = vpop.f32.mrf.mxu0
        %v1375 = vadd.f32 %v1235, %v1374
        %1376 = vmatmul.f32.gmra.mxu0 %v1161
        %v1377 = vpop.f32.mrf.mxu0
        %v1378 = vadd.f32 %v1240, %v1377
        %1379 = vmatmul.f32.gmra.mxu0 %v1162
        %v1380 = vpop.f32.mrf.mxu0
        %v1381 = vadd.f32 %v1245, %v1380
        %1382 = vmatmul.f32.gmra.mxu0 %v1163
        %v1383 = vpop.f32.mrf.mxu0
        %v1384 = vadd.f32 %v1250, %v1383
        %1385 = vmatmul.f32.gmra.mxu0 %v1164
        %v1386 = vpop.f32.mrf.mxu0
        %v1387 = vadd.f32 %v1255, %v1386
        %1388 = vmatmul.f32.gmra.mxu0 %v1165
        %v1389 = vpop.f32.mrf.mxu0
        %v1390 = vadd.f32 %v1260, %v1389
        %1391 = vdwg.mxu0
        %1392 = vst [vmem:[%s322] sm:$0xff] %v1280
        %1393 = vst [vmem:[%s322 + $0x8] sm:$0xff] %v1345
        %1394 = vst [vmem:[%s322 + $0x10] sm:$0xff] %v1283
        %1395 = vst [vmem:[%s322 + $0x18] sm:$0xff] %v1348
        %1396 = vst [vmem:[%s322 + $0x20] sm:$0xff] %v1286
        %1397 = vst [vmem:[%s322 + $0x28] sm:$0xff] %v1351
        %1398 = vst [vmem:[%s322 + $0x30] sm:$0xff] %v1289
        %1399 = vst [vmem:[%s322 + $0x38] sm:$0xff] %v1354
        %1400 = vst [vmem:[%s322 + $0x40] sm:$0xff] %v1292
        %1401 = vst [vmem:[%s322 + $0x48] sm:$0xff] %v1357
        %1402 = vst [vmem:[%s322 + $0x50] sm:$0xff] %v1295
        %1403 = vst [vmem:[%s322 + $0x58] sm:$0xff] %v1360
        %1404 = vst [vmem:[%s322 + $0x60] sm:$0xff] %v1298
        %1405 = vst [vmem:[%s322 + $0x68] sm:$0xff] %v1363
        %1406 = vst [vmem:[%s322 + $0x70] sm:$0xff] %v1301
        %1407 = vst [vmem:[%s322 + $0x78] sm:$0xff] %v1366
        %1408 = vst [vmem:[%s322 + $0x80] sm:$0xff] %v1304
        %1409 = vst [vmem:[%s322 + $0x88] sm:$0xff] %v1369
        %1410 = vst [vmem:[%s322 + $0x90] sm:$0xff] %v1307
        %1411 = vst [vmem:[%s322 + $0x98] sm:$0xff] %v1372
        %1412 = vst [vmem:[%s322 + $0xa0] sm:$0xff] %v1310
        %1413 = vst [vmem:[%s322 + $0xa8] sm:$0xff] %v1375
        %1414 = vst [vmem:[%s322 + $0xb0] sm:$0xff] %v1313
        %1415 = vst [vmem:[%s322 + $0xb8] sm:$0xff] %v1378
        %1416 = vst [vmem:[%s322 + $0xc0] sm:$0xff] %v1316
        %1417 = vst [vmem:[%s322 + $0xc8] sm:$0xff] %v1381
        %1418 = vst [vmem:[%s322 + $0xd0] sm:$0xff] %v1319
        %1419 = vst [vmem:[%s322 + $0xd8] sm:$0xff] %v1384
        %1420 = vst [vmem:[%s322 + $0xe0] sm:$0xff] %v1322
        %1421 = vst [vmem:[%s322 + $0xe8] sm:$0xff] %v1387
        %1422 = vst [vmem:[%s322 + $0xf0] sm:$0xff] %v1325
        %1423 = vst [vmem:[%s322 + $0xf8] sm:$0xff] %v1390
        %s1424 = sand.u32 %s167, 1
        %s1425 = scalar_lea.sflag [#allocation4], %s1424
        %s1426 = sand.u32 %s167, 1
        %s1427 = smul.addr %s1426, 256
        %s1428 = scalar_lea.vmem [#allocation9], %s1427
        // Predicated region
        $region53: #{tpu_custom_call.1} parent=39 // pred_check
          %p1429 = pneg %p177
        $region54: #{tpu_custom_call.1} parent=39 // pred_check_branch
          %1431 = sbr.rel (%p1429) target = $region56
        $region55: #{tpu_custom_call.1} parent=39 // pred_region
          %s1432 = smul.u32 2, %s31
          %1434 = vsyncadd %s1425, 0
          %s1435 = smul.addr %s30, 32
          %s1436 = sadd.s32 %s1432, %s1435
          %s1437 = smul.addr %s1436, 8
          %s1438 = scalar_lea.hbm %s5, %s1437
          %s1439 = sshll.u32 %s1428, 4
          %s1440 = int_to_ptr.vmem [resolvable:$true] %s1439
          %s1441 = sshll.u32 %s1438, 4
          %s1442 = int_to_ptr.hbm [resolvable:$true] %s1441
          %1447 = dma.vmem_to_hbm [thread:$0]  %s1440, 4096, %s1442, %s1425, 256, 256, 16
        $region56: #{tpu_custom_call.1} parent=39 // pred_fallthru
          _
      $region40: #{tpu_custom_call.1} parent=5 // pred_fallthru
        _
      %p1448 = scmp.le.s32.totalorder 2, %s21
      // Predicated region
      $region57: #{tpu_custom_call.1} parent=5 // pred_check
        %p1449 = pneg %p1448
      $region58: #{tpu_custom_call.1} parent=5 // pred_check_branch
        %1451 = sbr.rel (%p1449) target = $region60
      $region59: #{tpu_custom_call.1} parent=5 // pred_region
        %s1452 = ssub.s32 %s21, 2
        // Predicated region
        $region61: #{tpu_custom_call.1} parent=59 // pred_check
          %p1453 = pneg %p183
        $region62: #{tpu_custom_call.1} parent=59 // pred_check_branch
          %1455 = sbr.rel (%p1453) target = $region64
        $region63: #{tpu_custom_call.1} parent=59 // pred_region
          %s1456 = sand.u32 %s168, 1
          %s1457 = scalar_lea.sflag [#allocation4], %s1456
          %s1458 = sand.u32 %s168, 1
          %s1459 = smul.addr %s1458, 256
          %s1460 = scalar_lea.vmem [#allocation9], %s1459
          %1462 = dma.done %s1457, 4096
        $region64: #{tpu_custom_call.1} parent=59 // pred_fallthru
          _
      $region60: #{tpu_custom_call.1} parent=5 // pred_fallthru
        _
    $region6: #{tpu_custom_call.1} parent=1 // loop_footer
      %s25 = sadd.s32 1, %s21
    $region7: #{tpu_custom_call.1} parent=1 // loop_footer_branch
      %20 = sbr.rel target = $region3
    $region8: #{tpu_custom_call.1} parent=1 // loop_exit
      _
    %1463 = vsyncpa [#allocation3], 1
    %s1464 = scalar_lea.sflag [#allocation3], 1
    %1465 = vsyncpa %s1464, 1
    %1466 = vsyncpa [#allocation8], 1
    %s1467 = scalar_lea.sflag [#allocation8], 1
    %1468 = vsyncpa %s1467, 1
    %1469 = vsyncpa [#allocation4], 1
    %s1470 = scalar_lea.sflag [#allocation4], 1
    %1471 = vsyncpa %s1470, 1
    %1472 = vsyncpa [#allocation5], 1
    %s1473 = scalar_lea.sflag [#allocation5], 1
    %1474 = vsyncpa %s1473, 1

</llo_original>
